<compile_context>
chip_gen: v7x
topology: tpu7x:2x2x1
jax: 0.10.0
libtpu: 0.0.40
codegen_flags: <defaults>
</compile_context>

<pallas_src>
import functools

import jax
import jax.numpy as jnp
from jax.experimental import pallas as pl
from jax.experimental.pallas import tpu as pltpu


_LANE = 128
_MAX_TILE_PIXELS = 65536               # per-step pixel cap (v7x 64 MiB VMEM safe)
_MAX_BATCH_BLOCK = 16                  # static unroll bound inside the kernel
_VMEM_PIPELINE_BUDGET = 16 * 1024 * 1024  # double-buffered working-set budget


def _sublane_pad(rows, dtype):
    """Rows rounded up to the VMEM sublane tile for this dtype (f32:8, bf16:16)."""
    pack = max(1, 4 // jnp.dtype(dtype).itemsize)
    mult = 8 * pack
    return ((rows + mult - 1) // mult) * mult


def _choose_tiling(n, hw_pad, per_pixel_vmem_bytes):
    """Pick (batch_block, pixel_tile) for the grid.

    Targets: big per-step transfers (>= ~1-4 MiB where the problem allows),
    lane-aligned full tiles, and >= 2 grid steps so both v7x TensorCores work.
    """
    max_pixels = _VMEM_PIPELINE_BUDGET // (2 * per_pixel_vmem_bytes)
    max_pixels = max(_LANE, (max_pixels // _LANE) * _LANE)
    max_pixels = min(max_pixels, _MAX_TILE_PIXELS)

    k = hw_pad // _LANE
    if hw_pad > max_pixels:
        # Tile the pixel axis with the largest lane-aligned divisor so every
        # tile is full (unmasked stores); this always yields >= 2 pixel tiles.
        tile_hw = _LANE
        for d in range(min(k, max_pixels // _LANE), 0, -1):
            if k % d == 0:
                tile_hw = d * _LANE
                break
        nb = 1
    else:
        tile_hw = hw_pad
        # Small feature map: amortize the ~0.35us/step overhead over several
        # images per step.
        max_images = min(n, _MAX_BATCH_BLOCK, max(1, max_pixels // hw_pad))
        nb = 1
        for cand in range(max_images, 0, -1):
            if n % cand == 0:
                nb = cand
                break
        # Keep >= 2 grid steps when possible (v7x has 2 TensorCores).
        if (n // nb) * (hw_pad // tile_hw) < 2:
            for cand in range(nb, 0, -1):
                if n % cand == 0 and n // cand >= 2:
                    nb = cand
                    break

    # Final guard: if the grid would still be a single step, split the pixel
    # axis in two (stays lane-aligned when k is even).
    if (n // nb) * (hw_pad // tile_hw) < 2 and k >= 2 and k % 2 == 0:
        tile_hw = hw_pad // 2
    return nb, tile_hw


def _hooked_conv_kernel(oma_ref, x_ref, w_ref, b_ref, c_ref, ret_ref, out_ref,
                        *, nb):
    # x_ref: (nb, Cin, T)   w_ref: (Cout, Cin)   b_ref/c_ref: (Cout, 1) f32
    oma = oma_ref[0]          # (1 - ablation), float32 scalar in SMEM
    w = w_ref[...]
    b = b_ref[...]
    c = c_ref[...]
    # Static unroll over the (small) batch block; each image is a channel
    # matmul on the MXU with f32 accumulation and two lane-dense stores.
    for i in range(nb):
        y = jnp.dot(w, x_ref[i], preferred_element_type=jnp.float32)  # (Cout, T)
        # retain_layer: un-edited layer output.
        ret_ref[i] = (y + b).astype(ret_ref.dtype)
        # edit_layer (constants pre-folded): y*(1-a) + [b*(1-a) + r*a + off]
        out_ref[i] = (y * oma + c).astype(out_ref.dtype)


def instrumented_forward(x_nchw, weight, bias, ablation, replacement, offset,
                         out_dtype=None):
    """Hooked 1x1-conv layer. Returns (edited_out, retained), both NCHW.

    out_dtype may be set to jnp.bfloat16 to halve store traffic (the kernel
    still accumulates in float32); default preserves the input dtype.
    """
    N, Cin, H, W = x_nchw.shape
    Cout = weight.shape[0]
    HW = H * W
    x_dtype = x_nchw.dtype
    out_dtype = jnp.dtype(x_dtype) if out_dtype is None else jnp.dtype(out_dtype)

    # ---- host-side glue: free reshapes only (no transposes) ----
    x_mat = x_nchw.reshape(N, Cin, HW)                    # (N, Cin, HW)
    hw_pad = ((HW + _LANE - 1) // _LANE) * _LANE
    if hw_pad != HW:
        # Pad the pixel axis so every tile (and every output store) is
        # lane-aligned and unmasked; padded tail is sliced off afterwards.
        x_mat = jnp.pad(x_mat, ((0, 0), (0, 0), (0, hw_pad - HW)))

    w_mat = weight.reshape(Cout, Cin)                     # (Cout, Cin)
    a_f32 = jnp.asarray(ablation, jnp.float32)
    oma = jnp.float32(1.0) - a_f32                        # (1 - a), hoisted
    b_col = bias.reshape(Cout, 1).astype(jnp.float32)
    c_col = (b_col * oma
             + replacement.reshape(Cout, 1).astype(jnp.float32) * a_f32
             + offset.reshape(Cout, 1).astype(jnp.float32))
    oma_smem = oma.reshape(1)                             # f32 scalar for SMEM

    # ---- tiling: large lane-aligned pixel tiles, batched small maps ----
    x_bytes = jnp.dtype(x_dtype).itemsize
    o_bytes = jnp.dtype(out_dtype).itemsize
    per_pixel_vmem = (_sublane_pad(Cin, x_dtype) * x_bytes
                      + 2 * _sublane_pad(Cout, out_dtype) * o_bytes)
    nb, tile_hw = _choose_tiling(N, hw_pad, per_pixel_vmem)
    grid = (N // nb, hw_pad // tile_hw)

    cost = pl.CostEstimate(
        flops=2 * N * hw_pad * Cin * Cout,
        transcendentals=0,
        bytes_accessed=N * hw_pad * (Cin * x_bytes + 2 * Cout * o_bytes),
    )

    kernel = functools.partial(_hooked_conv_kernel, nb=nb)
    retained, edited = pl.pallas_call(
        kernel,
        out_shape=(jax.ShapeDtypeStruct((N, Cout, hw_pad), out_dtype),
                   jax.ShapeDtypeStruct((N, Cout, hw_pad), out_dtype)),
        grid=grid,
        in_specs=[
            pl.BlockSpec(memory_space=pltpu.MemorySpace.SMEM),             # (1-a)
            pl.BlockSpec((nb, Cin, tile_hw), lambda n, j: (n, 0, j)),      # x tile
            pl.BlockSpec((Cout, Cin), lambda n, j: (0, 0)),                # W (resident)
            pl.BlockSpec((Cout, 1), lambda n, j: (0, 0)),                  # bias (resident)
            pl.BlockSpec((Cout, 1), lambda n, j: (0, 0)),                  # c (resident)
        ],
        out_specs=(
            pl.BlockSpec((nb, Cout, tile_hw), lambda n, j: (n, 0, j)),     # retained
            pl.BlockSpec((nb, Cout, tile_hw), lambda n, j: (n, 0, j)),     # edited
        ),
        compiler_params=pltpu.CompilerParams(
            dimension_semantics=("parallel", "parallel"),
            vmem_limit_bytes=32 * 1024 * 1024,
        ),
        cost_estimate=cost,
    )(oma_smem, x_mat, w_mat, b_col, c_col)

    if hw_pad != HW:
        retained = retained[:, :, :HW]
        edited = edited[:, :, :HW]

    # Free reshapes back to NCHW (no transpose needed).
    out_nchw = edited.reshape(N, Cout, H, W)
    ret_nchw = retained.reshape(N, Cout, H, W)
    return out_nchw, ret_nchw


def _reference(x_nchw, weight, bias, ablation, replacement, offset):
    # Pure-JAX reference of the same semantics (for a correctness check).
    y = jnp.einsum('nchw,oc->nohw', x_nchw, weight.reshape(weight.shape[0], -1))
    y = y + bias[None, :, None, None]
    retained = y
    a = ablation
    edited = y * (1.0 - a) + replacement[None, :, None, None] * a \
        + offset[None, :, None, None]
    return edited, retained


if __name__ == "__main__":
    key = jax.random.PRNGKey(0)
    k_x, k_w, k_b, k_r, k_o = jax.random.split(key, 5)

    N, Cin, Cout, H, W = 2, 4, 8, 16, 16
    x = jax.random.normal(k_x, (N, Cin, H, W), dtype=jnp.float32)
    weight = jax.random.normal(k_w, (Cout, Cin, 1, 1), dtype=jnp.float32) * 0.1
    bias = jax.random.normal(k_b, (Cout,), dtype=jnp.float32) * 0.1
    replacement = jax.random.normal(k_r, (Cout,), dtype=jnp.float32)
    offset = jax.random.normal(k_o, (Cout,), dtype=jnp.float32) * 0.05
    ablation = 0.5

    out, retained = instrumented_forward(x, weight, bias, ablation,
                                         replacement, offset)
    jax.block_until_ready(out)
    jax.block_until_ready(retained)

    out_ref, ret_ref = _reference(x, weight, bias, ablation, replacement, offset)
    assert jnp.allclose(out, out_ref, atol=1e-4, rtol=1e-4)
    assert jnp.allclose(retained, ret_ref, atol=1e-4, rtol=1e-4)

    print("KERNEL_OK")
</pallas_src>

<mosaic_0001>
module attributes {stable_mosaic.version = 11 : i64} {
  func.func @_hooked_conv_kernel(%arg0: i32, %arg1: i32, %arg2: memref<1xf32, #tpu.memory_space<smem>>, %arg3: memref<1x4x256xf32, #tpu.memory_space<vmem>>, %arg4: memref<8x4xf32, #tpu.memory_space<vmem>>, %arg5: memref<8x1xf32, #tpu.memory_space<vmem>>, %arg6: memref<8x1xf32, #tpu.memory_space<vmem>>, %arg7: memref<1x8x256xf32, #tpu.memory_space<vmem>>, %arg8: memref<1x8x256xf32, #tpu.memory_space<vmem>>) attributes {dimension_semantics = [#tpu.dimension_semantics<parallel>, #tpu.dimension_semantics<parallel>], iteration_bounds = array<i64: 2, 1>, scalar_prefetch = 0 : i64, scratch_operands = 0 : i64, tpu.core_type = #tpu.core_type<tc>, window_params = [{transform_indices = @transform_0, window_bounds = array<i64: 1>}, {transform_indices = @transform_1, window_bounds = array<i64: 1, 4, 256>}, {pipeline_mode = #tpu.pipeline_mode<synchronous>, transform_indices = @transform_2, window_bounds = array<i64: 8, 4>}, {pipeline_mode = #tpu.pipeline_mode<synchronous>, transform_indices = @transform_3, window_bounds = array<i64: 8, 1>}, {pipeline_mode = #tpu.pipeline_mode<synchronous>, transform_indices = @transform_4, window_bounds = array<i64: 8, 1>}, {transform_indices = @transform_5, window_bounds = array<i64: 1, 8, 256>}, {transform_indices = @transform_6, window_bounds = array<i64: 1, 8, 256>}]} {
    %c0 = arith.constant 0 : index
    %0 = memref.load %arg2[%c0] : memref<1xf32, #tpu.memory_space<smem>>
    %c0_0 = arith.constant 0 : index
    %c0_1 = arith.constant 0 : index
    %1 = vector.load %arg4[%c0_0, %c0_1] : memref<8x4xf32, #tpu.memory_space<vmem>>, vector<8x4xf32>
    %c0_2 = arith.constant 0 : index
    %c0_3 = arith.constant 0 : index
    %2 = vector.load %arg5[%c0_2, %c0_3] : memref<8x1xf32, #tpu.memory_space<vmem>>, vector<8x1xf32>
    %c0_4 = arith.constant 0 : index
    %c0_5 = arith.constant 0 : index
    %3 = vector.load %arg6[%c0_4, %c0_5] : memref<8x1xf32, #tpu.memory_space<vmem>>, vector<8x1xf32>
    %c0_6 = arith.constant 0 : index
    %c0_7 = arith.constant 0 : index
    %c0_8 = arith.constant 0 : index
    %4 = vector.load %arg3[%c0_6, %c0_7, %c0_8] : memref<1x4x256xf32, #tpu.memory_space<vmem>>, vector<1x4x256xf32>
    %5 = vector.shape_cast %4 : vector<1x4x256xf32> to vector<4x256xf32>
    %cst = arith.constant dense<0.000000e+00> : vector<8x256xf32>
    %6 = tpu.matmul %1, %5, %cst {dimension_numbers = #tpu.dot_dimension_numbers<[1], [0], [0], [1], [0, 0, 1, 1], [], []>} : vector<8x4xf32>, vector<4x256xf32>, vector<8x256xf32> -> vector<8x256xf32>
    %7 = vector.broadcast %2 : vector<8x1xf32> to vector<8x256xf32>
    %8 = arith.addf %6, %7 : vector<8x256xf32>
    %c0_9 = arith.constant 0 : index
    %c0_10 = arith.constant 0 : index
    %c0_11 = arith.constant 0 : index
    %9 = vector.load %arg7[%c0_9, %c0_10, %c0_11] : memref<1x8x256xf32, #tpu.memory_space<vmem>>, vector<1x8x256xf32>
    %10 = vector.shape_cast %9 : vector<1x8x256xf32> to vector<8x256xf32>
    %11 = vector.shape_cast %8 : vector<8x256xf32> to vector<1x8x256xf32>
    tpu.vector_store %arg7[%c0_9, %c0_10, %c0_11], %11 {strides = array<i32>} : memref<1x8x256xf32, #tpu.memory_space<vmem>>, vector<1x8x256xf32>,
    %12 = vector.broadcast %0 : f32 to vector<8x256xf32>
    %13 = arith.mulf %6, %12 : vector<8x256xf32>
    %14 = vector.broadcast %3 : vector<8x1xf32> to vector<8x256xf32>
    %15 = arith.addf %13, %14 : vector<8x256xf32>
    %c0_12 = arith.constant 0 : index
    %c0_13 = arith.constant 0 : index
    %c0_14 = arith.constant 0 : index
    %16 = vector.load %arg8[%c0_12, %c0_13, %c0_14] : memref<1x8x256xf32, #tpu.memory_space<vmem>>, vector<1x8x256xf32>
    %17 = vector.shape_cast %16 : vector<1x8x256xf32> to vector<8x256xf32>
    %18 = vector.shape_cast %15 : vector<8x256xf32> to vector<1x8x256xf32>
    tpu.vector_store %arg8[%c0_12, %c0_13, %c0_14], %18 {strides = array<i32>} : memref<1x8x256xf32, #tpu.memory_space<vmem>>, vector<1x8x256xf32>,
    return
  }
  func.func @transform_0(%arg0: i32, %arg1: i32) -> i32 {
    %c0_i32 = arith.constant 0 : i32
    %c0_i32_0 = arith.constant 0 : i32
    return %c0_i32 : i32
  }
  func.func @transform_1(%arg0: i32, %arg1: i32) -> (i32, i32, i32) {
    %c0_i32 = arith.constant 0 : i32
    %c0_i32_0 = arith.constant 0 : i32
    return %arg0, %c0_i32, %arg1 : i32, i32, i32
  }
  func.func @transform_2(%arg0: i32, %arg1: i32) -> (i32, i32) {
    %c0_i32 = arith.constant 0 : i32
    %c0_i32_0 = arith.constant 0 : i32
    %c0_i32_1 = arith.constant 0 : i32
    return %c0_i32, %c0_i32_0 : i32, i32
  }
  func.func @transform_3(%arg0: i32, %arg1: i32) -> (i32, i32) {
    %c0_i32 = arith.constant 0 : i32
    %c0_i32_0 = arith.constant 0 : i32
    %c0_i32_1 = arith.constant 0 : i32
    return %c0_i32, %c0_i32_0 : i32, i32
  }
  func.func @transform_4(%arg0: i32, %arg1: i32) -> (i32, i32) {
    %c0_i32 = arith.constant 0 : i32
    %c0_i32_0 = arith.constant 0 : i32
    %c0_i32_1 = arith.constant 0 : i32
    return %c0_i32, %c0_i32_0 : i32, i32
  }
  func.func @transform_5(%arg0: i32, %arg1: i32) -> (i32, i32, i32) {
    %c0_i32 = arith.constant 0 : i32
    %c0_i32_0 = arith.constant 0 : i32
    return %arg0, %c0_i32, %arg1 : i32, i32, i32
  }
  func.func @transform_6(%arg0: i32, %arg1: i32) -> (i32, i32, i32) {
    %c0_i32 = arith.constant 0 : i32
    %c0_i32_0 = arith.constant 0 : i32
    return %arg0, %c0_i32, %arg1 : i32, i32, i32
  }
}

</mosaic_0001>

<llo_original>
// kernel: tpu_custom_call.1
$region0: #{tpu_custom_call.1}
  #allocation0 [shape = 'u32[]', space=smem, size = 0x4, offset = 0x4, fixed_abs, tag = 'smem constant byte address 0x4 - core index']
  #allocation1 [shape = 'u32[144,128]{1,0:T(1,128)}', space=vmem, size = 0x12000, scoped, tag = 'internal scratch']
  #allocation2 [shape = 'f32[1]{0:T(128)S(6)}', space=smem, size = 0x200, scoped, tag = 'scoped memory for tpu_custom_call.1']
  %s0 = inlined_call_operand.<no memory space> [shape: f32[1], index: 0, kind: input, shape index: {}]
  %s1 = inlined_call_operand.vmem [shape: f32[2,4,256], index: 1, kind: input, shape index: {}]
  %s2 = inlined_call_operand.vmem [shape: f32[8,4], index: 2, kind: input, shape index: {}]
  %s3 = inlined_call_operand.vmem [shape: f32[8,1], index: 3, kind: input, shape index: {}]
  %s4 = inlined_call_operand.vmem [shape: f32[8,1], index: 4, kind: input, shape index: {}]
  %s5 = inlined_call_operand.hbm [shape: f32[2,8,256], index: 5, kind: output, shape index: {0}]
  %s6 = inlined_call_operand.hbm [shape: f32[2,8,256], index: 6, kind: output, shape index: {1}]
  %7 = xla_tuple %s5, %s6
  %s8 = sld [smem:[#allocation0]]
  $region61: #{tpu_custom_call.1} parent=0
    _
  %s10 = ssub.s32 1, %s8
  %s11 = scalar_select 0, %s10, %s8
  %12 = sst [smem:[#allocation2]] %s0
  $region1: #{tpu_custom_call.1} parent=0
    #allocation3 [shape = 'u8[16384]{0}', space=vmem, size = 0x4000, scoped, tag = 'output window, operand 0']
    #allocation4 [shape = 's32[2]{0}', space=sflag, size = 0x8, scoped, tag = 'scoped memory for tpu_custom_call.1']
    #allocation5 [shape = 'u8[16384]{0}', space=vmem, size = 0x4000, scoped, tag = 'output window, operand 1']
    #allocation6 [shape = 's32[2]{0}', space=sflag, size = 0x8, scoped, tag = 'scoped memory for tpu_custom_call.1']
    %13 = vsyncpa [#allocation4], 0
    %s14 = scalar_lea.sflag [#allocation4], 1
    %15 = vsyncpa %s14, 0
    %16 = vsyncpa [#allocation6], 0
    %s17 = scalar_lea.sflag [#allocation6], 1
    %18 = vsyncpa %s17, 0
    loop: start=0, step=1, limit=4
    $region2: #{tpu_custom_call.1} parent=1 // loop_pre_header
      _
    $region3: #{tpu_custom_call.1} parent=1 // loop_header
      %s20 = sphi 0, %s24
      %p21 = scmp.ge.s32.totalorder %s20, 4
      %s27 = sphi 0, %s39
      %s28 = sphi 0, %s35
      %s29 = sphi 0, %s27
      %s30 = sphi 0, %s28
      %s31 = sphi 0, %s29
      %s32 = sphi 0, %s30
      %s40 = sphi 0, %s40
      %s42 = sphi 0, %s40
      %s43 = sphi 0, %s42
      %s57 = sphi 0, %s43
      %s65 = sphi 0, %s67
      %s68 = sphi 0, %s65
      %s69 = sphi 0, %s68
      %s85 = sphi 0, %s69
      %s89 = sphi 0, %s89
      %s91 = sphi 0, %s89
      %s92 = sphi 0, %s91
      %s106 = sphi 0, %s92
      %s110 = sphi 0, %s110
      %s112 = sphi 0, %s110
      %s113 = sphi 0, %s112
      %s127 = sphi 0, %s113
      %s131 = sphi 0, %s131
      %s133 = sphi 0, %s131
      %s134 = sphi 0, %s133
      %s148 = sphi 0, %s134
      %s156 = sphi 0, %s158
      %s159 = sphi 0, %s156
      %s160 = sphi 0, %s159
      %s176 = sphi 0, %s160
      %s184 = sphi 0, %s186
      %s187 = sphi 0, %s184
      %s188 = sphi 0, %s187
      %s204 = sphi 0, %s188
    $region4: #{tpu_custom_call.1} parent=1 // loop_header_branch
      %23 = sbr.rel (%p21) target = $region8
    $region5: #{tpu_custom_call.1} parent=1 // loop_body
      %s25 = ssub.s32 %s20, 1
      %s26 = ssub.s32 %s20, 2
      %s33 = sadd.s32 1, %s28
      %p34 = scmp.ge.s32.totalorder %s33, 1
      %s35 = scalar_select %p34, 0, %s33
      %s36 = sadd.s32 1, %s27
      %s37 = scalar_select %p34, %s36, %s27
      %p38 = scmp.ge.s32.totalorder %s37, 2
      %s39 = scalar_select %p38, 0, %s37
      %s41 = sadd.s32 %s40, 1
      %p44 = scmp.eq.s32.totalorder %s20, 1
      %p45 = scmp.ne.s32.totalorder %s40, %s42
      %p46 = scmp.eq.s32.totalorder %s20, 0
      %p47 = por %p45, %p46
      %p48 = scmp.ne.s32.totalorder %s40, %s42
      %p49 = scmp.eq.s32.totalorder %s25, 1
      %p50 = por %p48, %p49
      %p51 = scmp.ne.s32.totalorder %s42, %s43
      %p52 = scmp.eq.s32.totalorder %s25, 0
      %p53 = por %p51, %p52
      %p54 = scmp.ne.s32.totalorder %s42, %s43
      %p55 = scmp.eq.s32.totalorder %s26, 1
      %p56 = por %p54, %p55
      %p58 = scmp.ne.s32.totalorder %s43, %s57
      %p59 = scmp.eq.s32.totalorder %s26, 0
      %p60 = por %p58, %p59
      %s61 = ssub.s32 %s27, %s39
      %s62 = ssub.s32 %s28, %s35
      %s63 = sor.u32 %s61, %s62
      %p64 = scmp.eq.s32.totalorder %s63, 0
      %s66 = sadd.s32 %s65, 1
      %s67 = scalar_select %p64, %s65, %s66
      %p70 = pneg %p64
      %p71 = scmp.eq.s32.totalorder %s20, 1
      %p72 = por %p70, %p71
      %p73 = scmp.ne.s32.totalorder %s65, %s68
      %p74 = scmp.eq.s32.totalorder %s20, 0
      %p75 = por %p73, %p74
      %p76 = scmp.ne.s32.totalorder %s65, %s68
      %p77 = scmp.eq.s32.totalorder %s25, 1
      %p78 = por %p76, %p77
      %p79 = scmp.ne.s32.totalorder %s68, %s69
      %p80 = scmp.eq.s32.totalorder %s25, 0
      %p81 = por %p79, %p80
      %p82 = scmp.ne.s32.totalorder %s68, %s69
      %p83 = scmp.eq.s32.totalorder %s26, 1
      %p84 = por %p82, %p83
      %p86 = scmp.ne.s32.totalorder %s69, %s85
      %p87 = scmp.eq.s32.totalorder %s26, 0
      %p88 = por %p86, %p87
      %s90 = sadd.s32 %s89, 1
      %p93 = scmp.eq.s32.totalorder %s20, 1
      %p94 = scmp.ne.s32.totalorder %s89, %s91
      %p95 = scmp.eq.s32.totalorder %s20, 0
      %p96 = por %p94, %p95
      %p97 = scmp.ne.s32.totalorder %s89, %s91
      %p98 = scmp.eq.s32.totalorder %s25, 1
      %p99 = por %p97, %p98
      %p100 = scmp.ne.s32.totalorder %s91, %s92
      %p101 = scmp.eq.s32.totalorder %s25, 0
      %p102 = por %p100, %p101
      %p103 = scmp.ne.s32.totalorder %s91, %s92
      %p104 = scmp.eq.s32.totalorder %s26, 1
      %p105 = por %p103, %p104
      %p107 = scmp.ne.s32.totalorder %s92, %s106
      %p108 = scmp.eq.s32.totalorder %s26, 0
      %p109 = por %p107, %p108
      %s111 = sadd.s32 %s110, 1
      %p114 = scmp.eq.s32.totalorder %s20, 1
      %p115 = scmp.ne.s32.totalorder %s110, %s112
      %p116 = scmp.eq.s32.totalorder %s20, 0
      %p117 = por %p115, %p116
      %p118 = scmp.ne.s32.totalorder %s110, %s112
      %p119 = scmp.eq.s32.totalorder %s25, 1
      %p120 = por %p118, %p119
      %p121 = scmp.ne.s32.totalorder %s112, %s113
      %p122 = scmp.eq.s32.totalorder %s25, 0
      %p123 = por %p121, %p122
      %p124 = scmp.ne.s32.totalorder %s112, %s113
      %p125 = scmp.eq.s32.totalorder %s26, 1
      %p126 = por %p124, %p125
      %p128 = scmp.ne.s32.totalorder %s113, %s127
      %p129 = scmp.eq.s32.totalorder %s26, 0
      %p130 = por %p128, %p129
      %s132 = sadd.s32 %s131, 1
      %p135 = scmp.eq.s32.totalorder %s20, 1
      %p136 = scmp.ne.s32.totalorder %s131, %s133
      %p137 = scmp.eq.s32.totalorder %s20, 0
      %p138 = por %p136, %p137
      %p139 = scmp.ne.s32.totalorder %s131, %s133
      %p140 = scmp.eq.s32.totalorder %s25, 1
      %p141 = por %p139, %p140
      %p142 = scmp.ne.s32.totalorder %s133, %s134
      %p143 = scmp.eq.s32.totalorder %s25, 0
      %p144 = por %p142, %p143
      %p145 = scmp.ne.s32.totalorder %s133, %s134
      %p146 = scmp.eq.s32.totalorder %s26, 1
      %p147 = por %p145, %p146
      %p149 = scmp.ne.s32.totalorder %s134, %s148
      %p150 = scmp.eq.s32.totalorder %s26, 0
      %p151 = por %p149, %p150
      %s152 = ssub.s32 %s27, %s39
      %s153 = ssub.s32 %s28, %s35
      %s154 = sor.u32 %s152, %s153
      %p155 = scmp.eq.s32.totalorder %s154, 0
      %s157 = sadd.s32 %s156, 1
      %s158 = scalar_select %p155, %s156, %s157
      %p161 = pneg %p155
      %p162 = scmp.eq.s32.totalorder %s20, 1
      %p163 = por %p161, %p162
      %p164 = scmp.ne.s32.totalorder %s156, %s159
      %p165 = scmp.eq.s32.totalorder %s20, 0
      %p166 = por %p164, %p165
      %p167 = scmp.ne.s32.totalorder %s156, %s159
      %p168 = scmp.eq.s32.totalorder %s25, 1
      %p169 = por %p167, %p168
      %p170 = scmp.ne.s32.totalorder %s159, %s160
      %p171 = scmp.eq.s32.totalorder %s25, 0
      %p172 = por %p170, %p171
      %p173 = scmp.ne.s32.totalorder %s159, %s160
      %p174 = scmp.eq.s32.totalorder %s26, 1
      %p175 = por %p173, %p174
      %p177 = scmp.ne.s32.totalorder %s160, %s176
      %p178 = scmp.eq.s32.totalorder %s26, 0
      %p179 = por %p177, %p178
      %s180 = ssub.s32 %s27, %s39
      %s181 = ssub.s32 %s28, %s35
      %s182 = sor.u32 %s180, %s181
      %p183 = scmp.eq.s32.totalorder %s182, 0
      %s185 = sadd.s32 %s184, 1
      %s186 = scalar_select %p183, %s184, %s185
      %p189 = pneg %p183
      %p190 = scmp.eq.s32.totalorder %s20, 1
      %p191 = por %p189, %p190
      %p192 = scmp.ne.s32.totalorder %s184, %s187
      %p193 = scmp.eq.s32.totalorder %s20, 0
      %p194 = por %p192, %p193
      %p195 = scmp.ne.s32.totalorder %s184, %s187
      %p196 = scmp.eq.s32.totalorder %s25, 1
      %p197 = por %p195, %p196
      %p198 = scmp.ne.s32.totalorder %s187, %s188
      %p199 = scmp.eq.s32.totalorder %s25, 0
      %p200 = por %p198, %p199
      %p201 = scmp.ne.s32.totalorder %s187, %s188
      %p202 = scmp.eq.s32.totalorder %s26, 1
      %p203 = por %p201, %p202
      %p205 = scmp.ne.s32.totalorder %s188, %s204
      %p206 = scmp.eq.s32.totalorder %s26, 0
      %p207 = por %p205, %p206
      %p208 = scmp.le.s32.totalorder 1, %s20
      %p209 = scmp.lt.s32.totalorder %s20, 3
      %p210 = pnand %p208, %p209
      %p211 = pneg %p210
      // Predicated region
      $region9: #{tpu_custom_call.1} parent=5 // pred_check
        _
      $region10: #{tpu_custom_call.1} parent=5 // pred_check_branch
        %213 = sbr.rel (%p210) target = $region12
      $region11: #{tpu_custom_call.1} parent=5 // pred_region
        %s214 = ssub.s32 %s20, 1
        // Predicated region
        $region13: #{tpu_custom_call.1} parent=11 // pred_check
          %p215 = pneg %p53
        $region14: #{tpu_custom_call.1} parent=11 // pred_check_branch
          %217 = sbr.rel (%p215) target = $region16
        $region15: #{tpu_custom_call.1} parent=11 // pred_region
          _
        $region16: #{tpu_custom_call.1} parent=11 // pred_fallthru
          _
        // Predicated region
        $region17: #{tpu_custom_call.1} parent=11 // pred_check
          %p218 = pneg %p102
        $region18: #{tpu_custom_call.1} parent=11 // pred_check_branch
          %220 = sbr.rel (%p218) target = $region20
        $region19: #{tpu_custom_call.1} parent=11 // pred_region
          _
        $region20: #{tpu_custom_call.1} parent=11 // pred_fallthru
          _
        // Predicated region
        $region21: #{tpu_custom_call.1} parent=11 // pred_check
          %p221 = pneg %p123
        $region22: #{tpu_custom_call.1} parent=11 // pred_check_branch
          %223 = sbr.rel (%p221) target = $region24
        $region23: #{tpu_custom_call.1} parent=11 // pred_region
          _
        $region24: #{tpu_custom_call.1} parent=11 // pred_fallthru
          _
        // Predicated region
        $region25: #{tpu_custom_call.1} parent=11 // pred_check
          %p224 = pneg %p144
        $region26: #{tpu_custom_call.1} parent=11 // pred_check_branch
          %226 = sbr.rel (%p224) target = $region28
        $region27: #{tpu_custom_call.1} parent=11 // pred_region
          _
        $region28: #{tpu_custom_call.1} parent=11 // pred_fallthru
          _
      $region12: #{tpu_custom_call.1} parent=5 // pred_fallthru
        _
      %p227 = scmp.lt.s32.totalorder %s20, 2
      // Predicated region
      $region29: #{tpu_custom_call.1} parent=5 // pred_check
        %p228 = pneg %p227
      $region30: #{tpu_custom_call.1} parent=5 // pred_check_branch
        %230 = sbr.rel (%p228) target = $region32
      $region31: #{tpu_custom_call.1} parent=5 // pred_region
        // Predicated region
        $region33: #{tpu_custom_call.1} parent=31 // pred_check
          %p231 = pneg %p75
        $region34: #{tpu_custom_call.1} parent=31 // pred_check_branch
          %233 = sbr.rel (%p231) target = $region36
        $region35: #{tpu_custom_call.1} parent=31 // pred_region
          %s234 = smul.u32 2, %s28
          %p235 = scmp.lt.s32.totalorder %s27, 1
          %s236 = scalar_select %p235, %s27, 1
          %p237 = scmp.lt.s32.totalorder %s234, 1
          %s238 = scalar_select %p237, %s234, 1
          %s239 = smul.addr %s236, 2
          %s240 = sadd.s32 %s238, %s239
          %s241 = smul.addr %s240, 4
          %s242 = scalar_lea.vmem %s1, %s241
          %s243 = smul.u32 2, %s28
        $region36: #{tpu_custom_call.1} parent=31 // pred_fallthru
          _
      $region32: #{tpu_custom_call.1} parent=5 // pred_fallthru
        _
      %p244 = scmp.le.s32.totalorder 1, %s20
      %p245 = scmp.lt.s32.totalorder %s20, 3
      %p246 = pnand %p244, %p245
      %p247 = pneg %p246
      // Predicated region
      $region37: #{tpu_custom_call.1} parent=5 // pred_check
        _
      $region38: #{tpu_custom_call.1} parent=5 // pred_check_branch
        %249 = sbr.rel (%p246) target = $region40
      $region39: #{tpu_custom_call.1} parent=5 // pred_region
        %s250 = ssub.s32 %s20, 1
        %p251 = pneg %p53
        %p252 = pneg %p50
        %s253 = smul.u32 2, %s30
        %p254 = scmp.lt.s32.totalorder %s29, 1
        %s255 = scalar_select %p254, %s29, 1
        %p256 = scmp.lt.s32.totalorder %s253, 1
        %s257 = scalar_select %p256, %s253, 1
        %s258 = smul.addr %s255, 2
        %s259 = sadd.s32 %s257, %s258
        %s260 = smul.addr %s259, 4
        %s261 = scalar_lea.vmem %s1, %s260
        %p262 = pneg %p81
        %p263 = pneg %p78
        %p264 = pneg %p102
        %p265 = pneg %p99
        %p266 = pneg %p123
        %p267 = pneg %p120
        %p268 = pneg %p144
        %p269 = pneg %p141
        %p270 = pneg %p172
        %p271 = pneg %p169
        %s272 = sand.u32 %s159, 1
        %s273 = scalar_lea.sflag [#allocation4], %s272
        %s274 = sand.u32 %s159, 1
        %s275 = smul.addr %s274, 16
        %s276 = scalar_lea.vmem [#allocation3], %s275
        %p277 = pneg %p200
        %p278 = pneg %p197
        %s279 = sand.u32 %s187, 1
        %s280 = scalar_lea.sflag [#allocation6], %s279
        %s281 = sand.u32 %s187, 1
        %s282 = smul.addr %s281, 16
        %s283 = scalar_lea.vmem [#allocation5], %s282
        %s284 = smul.u32 2, %s30
        %p285 = scmp.lt.s32.totalorder %s29, 1
        %s286 = scalar_select %p285, %s29, 1
        %p287 = scmp.lt.s32.totalorder %s284, 1
        %s288 = scalar_select %p287, %s284, 1
        %s289 = smul.addr %s286, 2
        %s290 = sadd.s32 %s288, %s289
        %s291 = smul.addr %s290, 4
        %s292 = scalar_lea.vmem %s1, %s291
        %s293 = smul.u32 2, %s30
        %s294 = smul.u32 2, %s30
        %s295 = smul.u32 2, %s30
        %s296 = sld [smem:[#allocation2]]
        %v297 = vld [vmem:[%s2] sm:$0xff]
        %v298 = vld [vmem:[%s3] sm:$0xff]
        %v299 = vld [vmem:[%s4] sm:$0xff]
        %v300 = vld [vmem:[%s292] sm:$0xff]
        %v302 = vcombine.high %v300, %v300
        %vm303 = vcmask 31744
        %v305 = vsel %vm303, %v297, 0
        %vm307 = vcmask 1043456
        %v308 = vsel %vm307, %v300, 0
        %v310 = vsel %vm307, %v302, 0
        %312 = vmatprep.subr.mxu0 %v310
        %313 = vmatpush1.msra.mxu0 %v308
        %314 = vmatprep.subr.mxu0 0.0
        %315 = vmatpush1.msra.mxu0 0.0
        %316 = vmatprep.subr.mxu0 0.0
        %317 = vmatpush1.msra.mxu0 0.0
        %318 = vmatprep.subr.mxu0 0.0
        %319 = vmatpush1.msra.mxu0 0.0
        %320 = vmatprep.subr.mxu0 0.0
        %321 = vmatpush1.msra.mxu0 0.0
        %322 = vmatprep.subr.mxu0 0.0
        %323 = vmatpush1.msra.mxu0 0.0
        %324 = vmatprep.subr.mxu0 0.0
        %325 = vmatpush1.msra.mxu0 0.0
        %326 = vmatprep.subr.mxu0 0.0
        %327 = vmatpush1.msra.mxu0 0.0
        %328 = vmatprep.subr.mxu0 0.0
        %329 = vmatpush1.msra.mxu0 0.0
        %330 = vmatprep.subr.mxu0 0.0
        %331 = vmatpush1.msra.mxu0 0.0
        %332 = vmatprep.subr.mxu0 0.0
        %333 = vmatpush1.msra.mxu0 0.0
        %334 = vmatprep.subr.mxu0 0.0
        %335 = vmatpush1.msra.mxu0 0.0
        %336 = vmatprep.subr.mxu0 0.0
        %337 = vmatpush1.msra.mxu0 0.0
        %338 = vmatprep.subr.mxu0 0.0
        %339 = vmatpush1.msra.mxu0 0.0
        %340 = vmatprep.subr.mxu0 0.0
        %341 = vmatpush1.msra.mxu0 0.0
        %342 = vmatprep.subr.mxu0 0.0
        %343 = vmatpush1.msra.mxu0 0.0
        %344 = vmatprep.subr.mxu0 0.0
        %345 = vmatpush1.msra.mxu0 0.0
        %346 = vmatprep.subr.mxu0 0.0
        %347 = vmatpush1.msra.mxu0 0.0
        %348 = vmatprep.subr.mxu0 0.0
        %349 = vmatpush1.msra.mxu0 0.0
        %350 = vmatprep.subr.mxu0 0.0
        %351 = vmatpush1.msra.mxu0 0.0
        %352 = vmatprep.subr.mxu0 0.0
        %353 = vmatpush1.msra.mxu0 0.0
        %354 = vmatprep.subr.mxu0 0.0
        %355 = vmatpush1.msra.mxu0 0.0
        %356 = vmatprep.subr.mxu0 0.0
        %357 = vmatpush1.msra.mxu0 0.0
        %358 = vmatprep.subr.mxu0 0.0
        %359 = vmatpush1.msra.mxu0 0.0
        %360 = vmatprep.subr.mxu0 0.0
        %361 = vmatpush1.msra.mxu0 0.0
        %362 = vmatprep.subr.mxu0 0.0
        %363 = vmatpush1.msra.mxu0 0.0
        %364 = vmatprep.subr.mxu0 0.0
        %365 = vmatpush1.msra.mxu0 0.0
        %366 = vmatprep.subr.mxu0 0.0
        %367 = vmatpush1.msra.mxu0 0.0
        %368 = vmatprep.subr.mxu0 0.0
        %369 = vmatpush1.msra.mxu0 0.0
        %370 = vmatprep.subr.mxu0 0.0
        %371 = vmatpush1.msra.mxu0 0.0
        %372 = vmatprep.subr.mxu0 0.0
        %373 = vmatpush1.msra.mxu0 0.0
        %374 = vmatprep.subr.mxu0 0.0
        %375 = vmatpush1.msra.mxu0 0.0
        %376 = vmatprep.mubr.f32.mxu0 0.0
        %377 = vmatmul.mubr.f32.gmra.mrb[0].mxu0 %v305
        %v378 = vpop.f32.mrb[0].mxu0
        %v379 = vadd.f32 0.0, %v378
        %v380 = vpop.f32.mrb[0].mxu0
        %v381 = vadd.f32 0.0, %v380
        %382 = vdwg.mxu0
        %384 = vset.pattern.permute.xlu0 0
        %385 = vperm.xlu0 %384, %v298
        %v386 = vpop.permute.xlu0 %385
        %v388 = vadd.f32 %v379, %v386
        %v389 = vadd.f32 %v381, %v386
        %390 = vst [vmem:[%s276] sm:$0xff] %v388
        %391 = vst [vmem:[%s276 + $0x8] sm:$0xff] %v389
        %v392 = vstv %s296
        %v393 = vmul.f32 %v379, %v392
        %v394 = vmul.f32 %v381, %v392
        %396 = vset.pattern.permute.xlu0 0
        %397 = vperm.xlu0 %396, %v299
        %v398 = vpop.permute.xlu0 %397
        %v400 = vadd.f32 %v393, %v398
        %v401 = vadd.f32 %v394, %v398
        %402 = vst [vmem:[%s283] sm:$0xff] %v400
        %403 = vst [vmem:[%s283 + $0x8] sm:$0xff] %v401
        %s404 = sand.u32 %s159, 1
        %s405 = scalar_lea.sflag [#allocation4], %s404
        %s406 = sand.u32 %s159, 1
        %s407 = smul.addr %s406, 16
        %s408 = scalar_lea.vmem [#allocation3], %s407
        %s409 = sand.u32 %s187, 1
        %s410 = scalar_lea.sflag [#allocation6], %s409
        %s411 = sand.u32 %s187, 1
        %s412 = smul.addr %s411, 16
        %s413 = scalar_lea.vmem [#allocation5], %s412
        // Predicated region
        $region41: #{tpu_custom_call.1} parent=39 // pred_check
          %p414 = pneg %p169
        $region42: #{tpu_custom_call.1} parent=39 // pred_check_branch
          %416 = sbr.rel (%p414) target = $region44
        $region43: #{tpu_custom_call.1} parent=39 // pred_region
          %s417 = smul.u32 2, %s30
          %s419 = ssub.s32 256, 256
          %420 = vsyncadd %s405, %s419
          %s421 = smul.addr %s29, 2
          %s422 = sadd.s32 %s417, %s421
          %s423 = smul.addr %s422, 128
          %s424 = scalar_lea.hbm %s5, %s423
          %s426 = sshll.u32 %s408, 4
          %s427 = int_to_ptr.vmem [resolvable:$true] %s426
          %429 = dma.vmem_to_hbm [thread:$0]  %s427, 256, %s424, %s405
        $region44: #{tpu_custom_call.1} parent=39 // pred_fallthru
          _
        // Predicated region
        $region45: #{tpu_custom_call.1} parent=39 // pred_check
          %p430 = pneg %p197
        $region46: #{tpu_custom_call.1} parent=39 // pred_check_branch
          %432 = sbr.rel (%p430) target = $region48
        $region47: #{tpu_custom_call.1} parent=39 // pred_region
          %s433 = smul.u32 2, %s30
          %s435 = ssub.s32 256, 256
          %436 = vsyncadd %s410, %s435
          %s437 = smul.addr %s29, 2
          %s438 = sadd.s32 %s433, %s437
          %s439 = smul.addr %s438, 128
          %s440 = scalar_lea.hbm %s6, %s439
          %s442 = sshll.u32 %s413, 4
          %s443 = int_to_ptr.vmem [resolvable:$true] %s442
          %445 = dma.vmem_to_hbm [thread:$0]  %s443, 256, %s440, %s410
        $region48: #{tpu_custom_call.1} parent=39 // pred_fallthru
          _
      $region40: #{tpu_custom_call.1} parent=5 // pred_fallthru
        _
      %p446 = scmp.le.s32.totalorder 2, %s20
      // Predicated region
      $region49: #{tpu_custom_call.1} parent=5 // pred_check
        %p447 = pneg %p446
      $region50: #{tpu_custom_call.1} parent=5 // pred_check_branch
        %449 = sbr.rel (%p447) target = $region52
      $region51: #{tpu_custom_call.1} parent=5 // pred_region
        %s450 = ssub.s32 %s20, 2
        // Predicated region
        $region53: #{tpu_custom_call.1} parent=51 // pred_check
          %p451 = pneg %p175
        $region54: #{tpu_custom_call.1} parent=51 // pred_check_branch
          %453 = sbr.rel (%p451) target = $region56
        $region55: #{tpu_custom_call.1} parent=51 // pred_region
          %s454 = sand.u32 %s160, 1
          %s455 = scalar_lea.sflag [#allocation4], %s454
          %s456 = sand.u32 %s160, 1
          %s457 = smul.addr %s456, 16
          %s458 = scalar_lea.vmem [#allocation3], %s457
          %459 = dma.done %s455, 256
        $region56: #{tpu_custom_call.1} parent=51 // pred_fallthru
          _
        // Predicated region
        $region57: #{tpu_custom_call.1} parent=51 // pred_check
          %p460 = pneg %p203
        $region58: #{tpu_custom_call.1} parent=51 // pred_check_branch
          %462 = sbr.rel (%p460) target = $region60
        $region59: #{tpu_custom_call.1} parent=51 // pred_region
          %s463 = sand.u32 %s188, 1
          %s464 = scalar_lea.sflag [#allocation6], %s463
          %s465 = sand.u32 %s188, 1
          %s466 = smul.addr %s465, 16
          %s467 = scalar_lea.vmem [#allocation5], %s466
          %468 = dma.done %s464, 256
        $region60: #{tpu_custom_call.1} parent=51 // pred_fallthru
          _
      $region52: #{tpu_custom_call.1} parent=5 // pred_fallthru
        _
    $region6: #{tpu_custom_call.1} parent=1 // loop_footer
      %s24 = sadd.s32 1, %s20
    $region7: #{tpu_custom_call.1} parent=1 // loop_footer_branch
      %19 = sbr.rel target = $region3
    $region8: #{tpu_custom_call.1} parent=1 // loop_exit
      _
    %469 = vsyncpa [#allocation4], 1
    %s470 = scalar_lea.sflag [#allocation4], 1
    %471 = vsyncpa %s470, 1
    %472 = vsyncpa [#allocation6], 1
    %s473 = scalar_lea.sflag [#allocation6], 1
    %474 = vsyncpa %s473, 1

</llo_original>
